<compile_context>
chip_gen: v5e
topology: v5e:2x2
jax: 0.10.0
libtpu: 0.0.40
codegen_flags: <defaults>
</compile_context>

<pallas_src>
import functools

import jax
import jax.numpy as jnp
from jax.experimental import pallas as pl
from jax.experimental.pallas import tpu as pltpu


def _round_up(x, m):
    return (x + m - 1) // m * m


def _pconv2_2_kernel(x2_ref, w_ref, o_ref, xpad_ref, *, dim_conv, ksize, pad):
    """One (batch-element, row-tile) grid step.

    x2_ref  : (1, dim_conv, H, W)        conv-half image for this batch element
                                         (index_map constant in the row-tile axis,
                                         so the block stays resident in VMEM).
    w_ref   : (dim_conv*dim_conv*k*k,)   flattened conv weight (OIHW) in SMEM.
    o_ref   : (1, dim_conv, ht, W)       conv-half output row tile (aliased buffer).
    xpad_ref: (dim_conv, H+2*pad, Wp)    f32 scratch; H zero-padded, lane axis
                                         padded to 128-aligned Wp (>= W+pad) whose
                                         slack is zeroed so kw shifts are aligned
                                         lane rolls wrapping into zeros (no masks).
    """
    h_tile = pl.program_id(1)
    h_img = x2_ref.shape[2]
    w_img = x2_ref.shape[3]
    ht = o_ref.shape[2]
    wp = xpad_ref.shape[2]

    # Build the padded f32 copy of the conv half once per batch element (first
    # row tile).  Only the pad border / lane slack is zeroed (never overwritten
    # below), and any bf16->f32 cast happens once here rather than per tap.
    @pl.when(h_tile == 0)
    def _():
        if pad > 0:
            xpad_ref[:, :pad, :] = jnp.zeros((dim_conv, pad, wp), jnp.float32)
            xpad_ref[:, pad + h_img:, :] = jnp.zeros((dim_conv, pad, wp), jnp.float32)
        if wp > w_img:
            xpad_ref[:, pad:pad + h_img, w_img:] = jnp.zeros(
                (dim_conv, h_img, wp - w_img), jnp.float32)
        xpad_ref[:, pad:pad + h_img, :w_img] = x2_ref[0].astype(jnp.float32)

    row0 = pl.multiple_of(h_tile * ht, ht)

    # Loop order (ci, kh, kw outer; co innermost): each (ci, kh) row slab is
    # loaded once (lane-aligned), each shifted patch is built once (XLU roll)
    # and reused for every output channel.
    acc = [jnp.zeros((ht, wp), jnp.float32) for _ in range(dim_conv)]
    for ci in range(dim_conv):
        for kh in range(ksize):
            rows = xpad_ref[ci, pl.ds(row0 + kh, ht), :]      # (ht, wp), aligned
            for kw in range(ksize):
                d = kw - pad
                if d == 0:
                    patch = rows
                else:
                    # patch[:, j] = rows[:, j + d]; out-of-range columns wrap
                    # into the zeroed lane slack, so no edge mask is needed.
                    patch = pltpu.roll(rows, (-d) % wp, 1)
                for co in range(dim_conv):
                    coeff = w_ref[((co * dim_conv + ci) * ksize + kh) * ksize + kw]
                    acc[co] = acc[co] + patch * coeff

    for co in range(dim_conv):
        o_ref[0, co] = acc[co][:, :w_img].astype(o_ref.dtype)


def _pick_row_tile(h, w, dim_conv, itemsize, target_bytes=1 << 20):
    """Largest row tile (multiple of 8 dividing H, or H itself) whose conv-half
    output block stays under ~target_bytes, to amortize per-grid-step overhead."""
    if h % 8 != 0:
        return h
    best = 8
    for ht in range(8, h + 1, 8):
        if h % ht == 0 and dim_conv * ht * w * itemsize <= target_bytes:
            best = ht
    return best


def pconv2_2_forward(x, weight, kernel_size, *, row_tile=None):
    """PConv2_2 forward: out[:, :dc] = x[:, :dc]; out[:, dc:] = conv_same(x[:, dc:]).

    The output aliases x (input_output_aliases={0: 0}); donate x to make it truly
    in-place (without donation XLA inserts a copy of x first -- still correct).
    """
    n, c, h, w = x.shape
    c_out, c_in, kh_, kw_ = weight.shape
    assert kernel_size % 2 == 1, (
        "even kernel_size unsupported: torch 'same' padding would be asymmetric")
    assert kh_ == kw_ == kernel_size and c_out == c_in
    dim_conv = c_in
    assert c == 2 * dim_conv, "PConv2_2 requires dim == 2 * dim_conv"
    pad = (kernel_size - 1) // 2

    ht = row_tile if row_tile is not None else _pick_row_tile(
        h, w, dim_conv, x.dtype.itemsize)
    assert h % ht == 0, (h, ht)
    grid = (n, h // ht)

    # Lane-padded scratch width: 128-aligned and >= w + pad so kw shifts are
    # aligned rolls wrapping into zeroed slack.  Free for w < 128 (a row occupies
    # a full vreg column either way).
    wp = _round_up(w + pad, 128)

    w_flat = weight.astype(jnp.float32).reshape(-1)

    kernel = functools.partial(
        _pconv2_2_kernel, dim_conv=dim_conv, ksize=kernel_size, pad=pad)

    itemsize = x.dtype.itemsize
    conv_half_bytes = n * dim_conv * h * w * itemsize
    flops = 2 * n * h * w * kernel_size * kernel_size * dim_conv * dim_conv
    # Conv-half read + conv-half write + weights (pass-through half never moves).
    bytes_accessed = int(2 * conv_half_bytes + w_flat.size * 4)

    # VMEM budget: double-buffered resident conv-half block + double-buffered
    # output row tile + padded scratch + headroom.
    x2_block_bytes = dim_conv * h * w * itemsize
    out_block_bytes = dim_conv * ht * w * itemsize
    scratch_bytes = dim_conv * (h + 2 * pad) * wp * 4
    vmem_limit = min(
        100 << 20,
        max(16 << 20,
            2 * x2_block_bytes + 2 * out_block_bytes + scratch_bytes + (4 << 20)))

    return pl.pallas_call(
        kernel,
        out_shape=jax.ShapeDtypeStruct((n, c, h, w), x.dtype),
        grid=grid,
        in_specs=[
            # Conv-half channels [dim_conv:2*dim_conv]: full image per batch
            # element, resident across the row-tile axis.  The pass-through half
            # is never read (and never written): it is preserved via aliasing.
            pl.BlockSpec((1, dim_conv, h, w), lambda ni, hi: (ni, 1, 0, 0)),
            # Flattened conv weight: whole array in SMEM, read as scalars.
            pl.BlockSpec(memory_space=pltpu.MemorySpace.SMEM),
        ],
        # Only the conv-half channel block is ever written back.
        out_specs=pl.BlockSpec((1, dim_conv, ht, w), lambda ni, hi: (ni, 1, hi, 0)),
        scratch_shapes=[pltpu.VMEM((dim_conv, h + 2 * pad, wp), jnp.float32)],
        input_output_aliases={0: 0},
        compiler_params=pltpu.CompilerParams(
            dimension_semantics=("parallel", "arbitrary"),
            vmem_limit_bytes=vmem_limit),
        cost_estimate=pl.CostEstimate(
            flops=flops, transcendentals=0, bytes_accessed=bytes_accessed),
    )(x, w_flat)


class PConv2_2:
    """JAX/Pallas equivalent of the PyTorch PConv2_2 module (forward only)."""

    def __init__(self, dim, kernel_size=3, n_div=2, key=None):
        assert kernel_size % 2 == 1, "only odd kernel_size ('same' padding) supported"
        self.dim = dim
        self.kernel_size = kernel_size
        self.dim_conv = dim // n_div
        assert 2 * self.dim_conv == dim, "PConv2_2 split requires dim == 2*(dim//n_div)"
        if key is None:
            key = jax.random.PRNGKey(0)
        # Synthetic weight matching nn.Conv2d(dim_conv, dim_conv, k, bias=False).
        fan_in = self.dim_conv * kernel_size * kernel_size
        bound = 1.0 / (fan_in ** 0.5)
        self.weight = jax.random.uniform(
            key, (self.dim_conv, self.dim_conv, kernel_size, kernel_size),
            dtype=jnp.float32, minval=-bound, maxval=bound)

    def __call__(self, x, row_tile=None):
        # x: (N, C, H, W) with C == 2 * dim_conv
        return pconv2_2_forward(x, self.weight, self.kernel_size, row_tile=row_tile)


def _reference_forward(x, weight):
    """Pure-JAX reference mirroring the torch module, for validation."""
    dc = weight.shape[0]
    x1 = x[:, :dc]
    x2 = x[:, dc:2 * dc]
    pad = (weight.shape[-1] - 1) // 2
    x2c = jax.lax.conv_general_dilated(
        x2, weight, window_strides=(1, 1), padding=((pad, pad), (pad, pad)),
        dimension_numbers=("NCHW", "OIHW", "NCHW"),
        precision=jax.lax.Precision.HIGHEST)
    return jnp.concatenate([x1, x2c], axis=1)


def _run_check(key, n, c, h, w, kernel_size, row_tile=None):
    k_x, k_w = jax.random.split(key)
    x = jax.random.normal(k_x, (n, c, h, w), dtype=jnp.float32)
    mod = PConv2_2(dim=c, kernel_size=kernel_size, n_div=2, key=k_w)
    out = jax.block_until_ready(mod(x, row_tile=row_tile))
    ref = _reference_forward(x, mod.weight)
    assert out.shape == (n, c, h, w), out.shape
    err = float(jnp.max(jnp.abs(out - ref)))
    assert jnp.allclose(out, ref, atol=1e-4, rtol=1e-4), f"mismatch, max err {err}"


if __name__ == "__main__":
    key = jax.random.PRNGKey(0)
    k1, k2, k3, k4 = jax.random.split(key, 4)

    # Primary small shape implied by the module: dim=4, n_div=2 -> dim_conv=2.
    _run_check(k1, n=2, c=4, h=16, w=16, kernel_size=3)
    # W not lane-aligned, dim_conv=4, single H tile.
    _run_check(k2, n=1, c=8, h=24, w=20, kernel_size=3)
    # 5x5 kernel, dim_conv=3 (pad=2 exercises wider lane wrap).
    _run_check(k3, n=2, c=6, h=16, w=16, kernel_size=5)
    # Forced small row tile: exercises multi-row-tile pipelining + H boundaries.
    _run_check(k4, n=1, c=4, h=32, w=16, kernel_size=3, row_tile=8)

    print("KERNEL_OK")
</pallas_src>

<mosaic_0001>
module attributes {stable_mosaic.version = 11 : i64} {
  func.func @_pconv2_2_kernel(%arg0: i32, %arg1: i32, %arg2: memref<1x2x16x16xf32, #tpu.memory_space<vmem>>, %arg3: memref<36xf32, #tpu.memory_space<smem>>, %arg4: memref<1x2x16x16xf32, #tpu.memory_space<vmem>>, %arg5: memref<2x18x128xf32, #tpu.memory_space<vmem>>) attributes {dimension_semantics = [#tpu.dimension_semantics<parallel>, #tpu.dimension_semantics<arbitrary>], iteration_bounds = array<i64: 2, 1>, scalar_prefetch = 0 : i64, scratch_operands = 1 : i64, tpu.core_type = #tpu.core_type<tc>, window_params = [{transform_indices = @transform_0, window_bounds = array<i64: 1, 2, 16, 16>}, {transform_indices = @transform_1, window_bounds = array<i64: 36>}, {transform_indices = @transform_2, window_bounds = array<i64: 1, 2, 16, 16>}]} {
    %c0_i32 = arith.constant 0 : i32
    %0 = arith.cmpi eq, %arg1, %c0_i32 : i32
    %1 = arith.extui %0 : i1 to i32
    %c0_i32_0 = arith.constant 0 : i32
    %2 = arith.cmpi ne, %1, %c0_i32_0 : i32
    scf.if %2 {
      %cst_37 = arith.constant 0.000000e+00 : f32
      %195 = vector.broadcast %cst_37 : f32 to vector<2x1x128xf32>
      %c0_38 = arith.constant 0 : index
      %c0_39 = arith.constant 0 : index
      %c0_40 = arith.constant 0 : index
      %196 = vector.load %arg5[%c0_38, %c0_39, %c0_40] : memref<2x18x128xf32, #tpu.memory_space<vmem>>, vector<2x1x128xf32>
      tpu.vector_store %arg5[%c0_38, %c0_39, %c0_40], %195 {strides = array<i32>} : memref<2x18x128xf32, #tpu.memory_space<vmem>>, vector<2x1x128xf32>,
      %cst_41 = arith.constant 0.000000e+00 : f32
      %197 = vector.broadcast %cst_41 : f32 to vector<2x1x128xf32>
      %c0_42 = arith.constant 0 : index
      %c17_43 = arith.constant 17 : index
      %c0_44 = arith.constant 0 : index
      %198 = vector.load %arg5[%c0_42, %c17_43, %c0_44] : memref<2x18x128xf32, #tpu.memory_space<vmem>>, vector<2x1x128xf32>
      tpu.vector_store %arg5[%c0_42, %c17_43, %c0_44], %197 {strides = array<i32>} : memref<2x18x128xf32, #tpu.memory_space<vmem>>, vector<2x1x128xf32>,
      %cst_45 = arith.constant 0.000000e+00 : f32
      %199 = vector.broadcast %cst_45 : f32 to vector<2x16x112xf32>
      %c0_46 = arith.constant 0 : index
      %c1_47 = arith.constant 1 : index
      %c16_48 = arith.constant 16 : index
      %200 = vector.load %arg5[%c0_46, %c1_47, %c16_48] : memref<2x18x128xf32, #tpu.memory_space<vmem>>, vector<2x16x112xf32>
      tpu.vector_store %arg5[%c0_46, %c1_47, %c16_48], %199 {strides = array<i32>} : memref<2x18x128xf32, #tpu.memory_space<vmem>>, vector<2x16x112xf32>,
      %c0_49 = arith.constant 0 : index
      %c0_50 = arith.constant 0 : index
      %c0_51 = arith.constant 0 : index
      %c0_52 = arith.constant 0 : index
      %201 = vector.load %arg2[%c0_49, %c0_50, %c0_51, %c0_52] : memref<1x2x16x16xf32, #tpu.memory_space<vmem>>, vector<1x2x16x16xf32>
      %202 = vector.shape_cast %201 : vector<1x2x16x16xf32> to vector<2x16x16xf32>
      %c0_53 = arith.constant 0 : index
      %c1_54 = arith.constant 1 : index
      %c0_55 = arith.constant 0 : index
      %203 = vector.load %arg5[%c0_53, %c1_54, %c0_55] : memref<2x18x128xf32, #tpu.memory_space<vmem>>, vector<2x16x16xf32>
      tpu.vector_store %arg5[%c0_53, %c1_54, %c0_55], %202 {strides = array<i32>} : memref<2x18x128xf32, #tpu.memory_space<vmem>>, vector<2x16x16xf32>,
    } else {
    }
    %c16_i32 = arith.constant 16 : i32
    %3 = arith.muli %arg1, %c16_i32 : i32
    %4 = tpu.assume_multiple %3, 16 : i32
    %cst = arith.constant 0.000000e+00 : f32
    %5 = vector.broadcast %cst : f32 to vector<16x128xf32>
    %cst_1 = arith.constant 0.000000e+00 : f32
    %6 = vector.broadcast %cst_1 : f32 to vector<16x128xf32>
    %c0_i32_2 = arith.constant 0 : i32
    %7 = arith.addi %4, %c0_i32_2 : i32
    %c0 = arith.constant 0 : index
    %8 = arith.index_cast %7 : i32 to index
    %c0_3 = arith.constant 0 : index
    %9 = vector.load %arg5[%c0, %8, %c0_3] : memref<2x18x128xf32, #tpu.memory_space<vmem>>, vector<1x16x128xf32>
    %10 = vector.shape_cast %9 : vector<1x16x128xf32> to vector<16x128xf32>
    %c1_i32 = arith.constant 1 : i32
    %11 = tpu.dynamic_rotate %10 by %c1_i32 dim 1 : vector<16x128xf32>, i32 -> vector<16x128xf32>
    %c0_4 = arith.constant 0 : index
    %12 = memref.load %arg3[%c0_4] : memref<36xf32, #tpu.memory_space<smem>>
    %13 = vector.broadcast %12 : f32 to vector<16x128xf32>
    %14 = arith.mulf %11, %13 : vector<16x128xf32>
    %15 = arith.addf %5, %14 : vector<16x128xf32>
    %c18 = arith.constant 18 : index
    %16 = memref.load %arg3[%c18] : memref<36xf32, #tpu.memory_space<smem>>
    %17 = vector.broadcast %16 : f32 to vector<16x128xf32>
    %18 = arith.mulf %11, %17 : vector<16x128xf32>
    %19 = arith.addf %6, %18 : vector<16x128xf32>
    %c1 = arith.constant 1 : index
    %20 = memref.load %arg3[%c1] : memref<36xf32, #tpu.memory_space<smem>>
    %21 = vector.broadcast %20 : f32 to vector<16x128xf32>
    %22 = arith.mulf %10, %21 : vector<16x128xf32>
    %23 = arith.addf %15, %22 : vector<16x128xf32>
    %c19 = arith.constant 19 : index
    %24 = memref.load %arg3[%c19] : memref<36xf32, #tpu.memory_space<smem>>
    %25 = vector.broadcast %24 : f32 to vector<16x128xf32>
    %26 = arith.mulf %10, %25 : vector<16x128xf32>
    %27 = arith.addf %19, %26 : vector<16x128xf32>
    %c127_i32 = arith.constant 127 : i32
    %28 = tpu.dynamic_rotate %10 by %c127_i32 dim 1 : vector<16x128xf32>, i32 -> vector<16x128xf32>
    %c2 = arith.constant 2 : index
    %29 = memref.load %arg3[%c2] : memref<36xf32, #tpu.memory_space<smem>>
    %30 = vector.broadcast %29 : f32 to vector<16x128xf32>
    %31 = arith.mulf %28, %30 : vector<16x128xf32>
    %32 = arith.addf %23, %31 : vector<16x128xf32>
    %c20 = arith.constant 20 : index
    %33 = memref.load %arg3[%c20] : memref<36xf32, #tpu.memory_space<smem>>
    %34 = vector.broadcast %33 : f32 to vector<16x128xf32>
    %35 = arith.mulf %28, %34 : vector<16x128xf32>
    %36 = arith.addf %27, %35 : vector<16x128xf32>
    %c1_i32_5 = arith.constant 1 : i32
    %37 = arith.addi %4, %c1_i32_5 : i32
    %c0_6 = arith.constant 0 : index
    %38 = arith.index_cast %37 : i32 to index
    %c0_7 = arith.constant 0 : index
    %39 = vector.load %arg5[%c0_6, %38, %c0_7] : memref<2x18x128xf32, #tpu.memory_space<vmem>>, vector<1x16x128xf32>
    %40 = vector.shape_cast %39 : vector<1x16x128xf32> to vector<16x128xf32>
    %c1_i32_8 = arith.constant 1 : i32
    %41 = tpu.dynamic_rotate %40 by %c1_i32_8 dim 1 : vector<16x128xf32>, i32 -> vector<16x128xf32>
    %c3 = arith.constant 3 : index
    %42 = memref.load %arg3[%c3] : memref<36xf32, #tpu.memory_space<smem>>
    %43 = vector.broadcast %42 : f32 to vector<16x128xf32>
    %44 = arith.mulf %41, %43 : vector<16x128xf32>
    %45 = arith.addf %32, %44 : vector<16x128xf32>
    %c21 = arith.constant 21 : index
    %46 = memref.load %arg3[%c21] : memref<36xf32, #tpu.memory_space<smem>>
    %47 = vector.broadcast %46 : f32 to vector<16x128xf32>
    %48 = arith.mulf %41, %47 : vector<16x128xf32>
    %49 = arith.addf %36, %48 : vector<16x128xf32>
    %c4 = arith.constant 4 : index
    %50 = memref.load %arg3[%c4] : memref<36xf32, #tpu.memory_space<smem>>
    %51 = vector.broadcast %50 : f32 to vector<16x128xf32>
    %52 = arith.mulf %40, %51 : vector<16x128xf32>
    %53 = arith.addf %45, %52 : vector<16x128xf32>
    %c22 = arith.constant 22 : index
    %54 = memref.load %arg3[%c22] : memref<36xf32, #tpu.memory_space<smem>>
    %55 = vector.broadcast %54 : f32 to vector<16x128xf32>
    %56 = arith.mulf %40, %55 : vector<16x128xf32>
    %57 = arith.addf %49, %56 : vector<16x128xf32>
    %c127_i32_9 = arith.constant 127 : i32
    %58 = tpu.dynamic_rotate %40 by %c127_i32_9 dim 1 : vector<16x128xf32>, i32 -> vector<16x128xf32>
    %c5 = arith.constant 5 : index
    %59 = memref.load %arg3[%c5] : memref<36xf32, #tpu.memory_space<smem>>
    %60 = vector.broadcast %59 : f32 to vector<16x128xf32>
    %61 = arith.mulf %58, %60 : vector<16x128xf32>
    %62 = arith.addf %53, %61 : vector<16x128xf32>
    %c23 = arith.constant 23 : index
    %63 = memref.load %arg3[%c23] : memref<36xf32, #tpu.memory_space<smem>>
    %64 = vector.broadcast %63 : f32 to vector<16x128xf32>
    %65 = arith.mulf %58, %64 : vector<16x128xf32>
    %66 = arith.addf %57, %65 : vector<16x128xf32>
    %c2_i32 = arith.constant 2 : i32
    %67 = arith.addi %4, %c2_i32 : i32
    %c0_10 = arith.constant 0 : index
    %68 = arith.index_cast %67 : i32 to index
    %c0_11 = arith.constant 0 : index
    %69 = vector.load %arg5[%c0_10, %68, %c0_11] : memref<2x18x128xf32, #tpu.memory_space<vmem>>, vector<1x16x128xf32>
    %70 = vector.shape_cast %69 : vector<1x16x128xf32> to vector<16x128xf32>
    %c1_i32_12 = arith.constant 1 : i32
    %71 = tpu.dynamic_rotate %70 by %c1_i32_12 dim 1 : vector<16x128xf32>, i32 -> vector<16x128xf32>
    %c6 = arith.constant 6 : index
    %72 = memref.load %arg3[%c6] : memref<36xf32, #tpu.memory_space<smem>>
    %73 = vector.broadcast %72 : f32 to vector<16x128xf32>
    %74 = arith.mulf %71, %73 : vector<16x128xf32>
    %75 = arith.addf %62, %74 : vector<16x128xf32>
    %c24 = arith.constant 24 : index
    %76 = memref.load %arg3[%c24] : memref<36xf32, #tpu.memory_space<smem>>
    %77 = vector.broadcast %76 : f32 to vector<16x128xf32>
    %78 = arith.mulf %71, %77 : vector<16x128xf32>
    %79 = arith.addf %66, %78 : vector<16x128xf32>
    %c7 = arith.constant 7 : index
    %80 = memref.load %arg3[%c7] : memref<36xf32, #tpu.memory_space<smem>>
    %81 = vector.broadcast %80 : f32 to vector<16x128xf32>
    %82 = arith.mulf %70, %81 : vector<16x128xf32>
    %83 = arith.addf %75, %82 : vector<16x128xf32>
    %c25 = arith.constant 25 : index
    %84 = memref.load %arg3[%c25] : memref<36xf32, #tpu.memory_space<smem>>
    %85 = vector.broadcast %84 : f32 to vector<16x128xf32>
    %86 = arith.mulf %70, %85 : vector<16x128xf32>
    %87 = arith.addf %79, %86 : vector<16x128xf32>
    %c127_i32_13 = arith.constant 127 : i32
    %88 = tpu.dynamic_rotate %70 by %c127_i32_13 dim 1 : vector<16x128xf32>, i32 -> vector<16x128xf32>
    %c8 = arith.constant 8 : index
    %89 = memref.load %arg3[%c8] : memref<36xf32, #tpu.memory_space<smem>>
    %90 = vector.broadcast %89 : f32 to vector<16x128xf32>
    %91 = arith.mulf %88, %90 : vector<16x128xf32>
    %92 = arith.addf %83, %91 : vector<16x128xf32>
    %c26 = arith.constant 26 : index
    %93 = memref.load %arg3[%c26] : memref<36xf32, #tpu.memory_space<smem>>
    %94 = vector.broadcast %93 : f32 to vector<16x128xf32>
    %95 = arith.mulf %88, %94 : vector<16x128xf32>
    %96 = arith.addf %87, %95 : vector<16x128xf32>
    %c0_i32_14 = arith.constant 0 : i32
    %97 = arith.addi %4, %c0_i32_14 : i32
    %c1_15 = arith.constant 1 : index
    %98 = arith.index_cast %97 : i32 to index
    %c0_16 = arith.constant 0 : index
    %99 = vector.load %arg5[%c1_15, %98, %c0_16] : memref<2x18x128xf32, #tpu.memory_space<vmem>>, vector<1x16x128xf32>
    %100 = vector.shape_cast %99 : vector<1x16x128xf32> to vector<16x128xf32>
    %c1_i32_17 = arith.constant 1 : i32
    %101 = tpu.dynamic_rotate %100 by %c1_i32_17 dim 1 : vector<16x128xf32>, i32 -> vector<16x128xf32>
    %c9 = arith.constant 9 : index
    %102 = memref.load %arg3[%c9] : memref<36xf32, #tpu.memory_space<smem>>
    %103 = vector.broadcast %102 : f32 to vector<16x128xf32>
    %104 = arith.mulf %101, %103 : vector<16x128xf32>
    %105 = arith.addf %92, %104 : vector<16x128xf32>
    %c27 = arith.constant 27 : index
    %106 = memref.load %arg3[%c27] : memref<36xf32, #tpu.memory_space<smem>>
    %107 = vector.broadcast %106 : f32 to vector<16x128xf32>
    %108 = arith.mulf %101, %107 : vector<16x128xf32>
    %109 = arith.addf %96, %108 : vector<16x128xf32>
    %c10 = arith.constant 10 : index
    %110 = memref.load %arg3[%c10] : memref<36xf32, #tpu.memory_space<smem>>
    %111 = vector.broadcast %110 : f32 to vector<16x128xf32>
    %112 = arith.mulf %100, %111 : vector<16x128xf32>
    %113 = arith.addf %105, %112 : vector<16x128xf32>
    %c28 = arith.constant 28 : index
    %114 = memref.load %arg3[%c28] : memref<36xf32, #tpu.memory_space<smem>>
    %115 = vector.broadcast %114 : f32 to vector<16x128xf32>
    %116 = arith.mulf %100, %115 : vector<16x128xf32>
    %117 = arith.addf %109, %116 : vector<16x128xf32>
    %c127_i32_18 = arith.constant 127 : i32
    %118 = tpu.dynamic_rotate %100 by %c127_i32_18 dim 1 : vector<16x128xf32>, i32 -> vector<16x128xf32>
    %c11 = arith.constant 11 : index
    %119 = memref.load %arg3[%c11] : memref<36xf32, #tpu.memory_space<smem>>
    %120 = vector.broadcast %119 : f32 to vector<16x128xf32>
    %121 = arith.mulf %118, %120 : vector<16x128xf32>
    %122 = arith.addf %113, %121 : vector<16x128xf32>
    %c29 = arith.constant 29 : index
    %123 = memref.load %arg3[%c29] : memref<36xf32, #tpu.memory_space<smem>>
    %124 = vector.broadcast %123 : f32 to vector<16x128xf32>
    %125 = arith.mulf %118, %124 : vector<16x128xf32>
    %126 = arith.addf %117, %125 : vector<16x128xf32>
    %c1_i32_19 = arith.constant 1 : i32
    %127 = arith.addi %4, %c1_i32_19 : i32
    %c1_20 = arith.constant 1 : index
    %128 = arith.index_cast %127 : i32 to index
    %c0_21 = arith.constant 0 : index
    %129 = vector.load %arg5[%c1_20, %128, %c0_21] : memref<2x18x128xf32, #tpu.memory_space<vmem>>, vector<1x16x128xf32>
    %130 = vector.shape_cast %129 : vector<1x16x128xf32> to vector<16x128xf32>
    %c1_i32_22 = arith.constant 1 : i32
    %131 = tpu.dynamic_rotate %130 by %c1_i32_22 dim 1 : vector<16x128xf32>, i32 -> vector<16x128xf32>
    %c12 = arith.constant 12 : index
    %132 = memref.load %arg3[%c12] : memref<36xf32, #tpu.memory_space<smem>>
    %133 = vector.broadcast %132 : f32 to vector<16x128xf32>
    %134 = arith.mulf %131, %133 : vector<16x128xf32>
    %135 = arith.addf %122, %134 : vector<16x128xf32>
    %c30 = arith.constant 30 : index
    %136 = memref.load %arg3[%c30] : memref<36xf32, #tpu.memory_space<smem>>
    %137 = vector.broadcast %136 : f32 to vector<16x128xf32>
    %138 = arith.mulf %131, %137 : vector<16x128xf32>
    %139 = arith.addf %126, %138 : vector<16x128xf32>
    %c13 = arith.constant 13 : index
    %140 = memref.load %arg3[%c13] : memref<36xf32, #tpu.memory_space<smem>>
    %141 = vector.broadcast %140 : f32 to vector<16x128xf32>
    %142 = arith.mulf %130, %141 : vector<16x128xf32>
    %143 = arith.addf %135, %142 : vector<16x128xf32>
    %c31 = arith.constant 31 : index
    %144 = memref.load %arg3[%c31] : memref<36xf32, #tpu.memory_space<smem>>
    %145 = vector.broadcast %144 : f32 to vector<16x128xf32>
    %146 = arith.mulf %130, %145 : vector<16x128xf32>
    %147 = arith.addf %139, %146 : vector<16x128xf32>
    %c127_i32_23 = arith.constant 127 : i32
    %148 = tpu.dynamic_rotate %130 by %c127_i32_23 dim 1 : vector<16x128xf32>, i32 -> vector<16x128xf32>
    %c14 = arith.constant 14 : index
    %149 = memref.load %arg3[%c14] : memref<36xf32, #tpu.memory_space<smem>>
    %150 = vector.broadcast %149 : f32 to vector<16x128xf32>
    %151 = arith.mulf %148, %150 : vector<16x128xf32>
    %152 = arith.addf %143, %151 : vector<16x128xf32>
    %c32 = arith.constant 32 : index
    %153 = memref.load %arg3[%c32] : memref<36xf32, #tpu.memory_space<smem>>
    %154 = vector.broadcast %153 : f32 to vector<16x128xf32>
    %155 = arith.mulf %148, %154 : vector<16x128xf32>
    %156 = arith.addf %147, %155 : vector<16x128xf32>
    %c2_i32_24 = arith.constant 2 : i32
    %157 = arith.addi %4, %c2_i32_24 : i32
    %c1_25 = arith.constant 1 : index
    %158 = arith.index_cast %157 : i32 to index
    %c0_26 = arith.constant 0 : index
    %159 = vector.load %arg5[%c1_25, %158, %c0_26] : memref<2x18x128xf32, #tpu.memory_space<vmem>>, vector<1x16x128xf32>
    %160 = vector.shape_cast %159 : vector<1x16x128xf32> to vector<16x128xf32>
    %c1_i32_27 = arith.constant 1 : i32
    %161 = tpu.dynamic_rotate %160 by %c1_i32_27 dim 1 : vector<16x128xf32>, i32 -> vector<16x128xf32>
    %c15 = arith.constant 15 : index
    %162 = memref.load %arg3[%c15] : memref<36xf32, #tpu.memory_space<smem>>
    %163 = vector.broadcast %162 : f32 to vector<16x128xf32>
    %164 = arith.mulf %161, %163 : vector<16x128xf32>
    %165 = arith.addf %152, %164 : vector<16x128xf32>
    %c33 = arith.constant 33 : index
    %166 = memref.load %arg3[%c33] : memref<36xf32, #tpu.memory_space<smem>>
    %167 = vector.broadcast %166 : f32 to vector<16x128xf32>
    %168 = arith.mulf %161, %167 : vector<16x128xf32>
    %169 = arith.addf %156, %168 : vector<16x128xf32>
    %c16 = arith.constant 16 : index
    %170 = memref.load %arg3[%c16] : memref<36xf32, #tpu.memory_space<smem>>
    %171 = vector.broadcast %170 : f32 to vector<16x128xf32>
    %172 = arith.mulf %160, %171 : vector<16x128xf32>
    %173 = arith.addf %165, %172 : vector<16x128xf32>
    %c34 = arith.constant 34 : index
    %174 = memref.load %arg3[%c34] : memref<36xf32, #tpu.memory_space<smem>>
    %175 = vector.broadcast %174 : f32 to vector<16x128xf32>
    %176 = arith.mulf %160, %175 : vector<16x128xf32>
    %177 = arith.addf %169, %176 : vector<16x128xf32>
    %c127_i32_28 = arith.constant 127 : i32
    %178 = tpu.dynamic_rotate %160 by %c127_i32_28 dim 1 : vector<16x128xf32>, i32 -> vector<16x128xf32>
    %c17 = arith.constant 17 : index
    %179 = memref.load %arg3[%c17] : memref<36xf32, #tpu.memory_space<smem>>
    %180 = vector.broadcast %179 : f32 to vector<16x128xf32>
    %181 = arith.mulf %178, %180 : vector<16x128xf32>
    %182 = arith.addf %173, %181 : vector<16x128xf32>
    %c35 = arith.constant 35 : index
    %183 = memref.load %arg3[%c35] : memref<36xf32, #tpu.memory_space<smem>>
    %184 = vector.broadcast %183 : f32 to vector<16x128xf32>
    %185 = arith.mulf %178, %184 : vector<16x128xf32>
    %186 = arith.addf %177, %185 : vector<16x128xf32>
    %187 = vector.extract_strided_slice %182 {offsets = [0, 0], sizes = [16, 16], strides = [1, 1]} : vector<16x128xf32> to vector<16x16xf32>
    %c0_29 = arith.constant 0 : index
    %c0_30 = arith.constant 0 : index
    %c0_31 = arith.constant 0 : index
    %c0_32 = arith.constant 0 : index
    %188 = vector.load %arg4[%c0_29, %c0_30, %c0_31, %c0_32] : memref<1x2x16x16xf32, #tpu.memory_space<vmem>>, vector<1x1x16x16xf32>
    %189 = vector.shape_cast %188 : vector<1x1x16x16xf32> to vector<16x16xf32>
    %190 = vector.shape_cast %187 : vector<16x16xf32> to vector<1x1x16x16xf32>
    tpu.vector_store %arg4[%c0_29, %c0_30, %c0_31, %c0_32], %190 {strides = array<i32>} : memref<1x2x16x16xf32, #tpu.memory_space<vmem>>, vector<1x1x16x16xf32>,
    %191 = vector.extract_strided_slice %186 {offsets = [0, 0], sizes = [16, 16], strides = [1, 1]} : vector<16x128xf32> to vector<16x16xf32>
    %c0_33 = arith.constant 0 : index
    %c1_34 = arith.constant 1 : index
    %c0_35 = arith.constant 0 : index
    %c0_36 = arith.constant 0 : index
    %192 = vector.load %arg4[%c0_33, %c1_34, %c0_35, %c0_36] : memref<1x2x16x16xf32, #tpu.memory_space<vmem>>, vector<1x1x16x16xf32>
    %193 = vector.shape_cast %192 : vector<1x1x16x16xf32> to vector<16x16xf32>
    %194 = vector.shape_cast %191 : vector<16x16xf32> to vector<1x1x16x16xf32>
    tpu.vector_store %arg4[%c0_33, %c1_34, %c0_35, %c0_36], %194 {strides = array<i32>} : memref<1x2x16x16xf32, #tpu.memory_space<vmem>>, vector<1x1x16x16xf32>,
    return
  }
  func.func @transform_0(%arg0: i32, %arg1: i32) -> (i32, i32, i32, i32) {
    %c1_i32 = arith.constant 1 : i32
    %c0_i32 = arith.constant 0 : i32
    %c0_i32_0 = arith.constant 0 : i32
    %c0_i32_1 = arith.constant 0 : i32
    return %arg0, %c1_i32, %c0_i32, %c0_i32_0 : i32, i32, i32, i32
  }
  func.func @transform_1(%arg0: i32, %arg1: i32) -> i32 {
    %c0_i32 = arith.constant 0 : i32
    %c0_i32_0 = arith.constant 0 : i32
    return %c0_i32 : i32
  }
  func.func @transform_2(%arg0: i32, %arg1: i32) -> (i32, i32, i32, i32) {
    %c1_i32 = arith.constant 1 : i32
    %c0_i32 = arith.constant 0 : i32
    %c0_i32_0 = arith.constant 0 : i32
    return %arg0, %c1_i32, %arg1, %c0_i32 : i32, i32, i32, i32
  }
}

</mosaic_0001>

<llo_original>
// kernel: tpu_custom_call.1
$region0: #{tpu_custom_call.1}
  #allocation0 [shape = 'u32[]', space=smem, size = 0x4, offset = 0x4, fixed_abs, tag = 'smem constant byte address 0x4 - core index']
  #allocation1 [shape = 'u32[72,128]{1,0:T(1,128)}', space=vmem, size = 0x9000, scoped, tag = 'internal scratch']
  #allocation2 [shape = 'f32[2,18,128]{2,1,0:T(8,128)}', space=vmem, size = 0x6000, scoped, tag = 'scratch operand']
  %s0 = inlined_call_operand.hbm [shape: f32[2,4,16,16], index: 0, kind: input, shape index: {}, may-alias: {0,2}]
  %s1 = inlined_call_operand.vmem [shape: f32[36], index: 1, kind: input, shape index: {}]
  %s2 = inlined_call_operand.hbm [shape: f32[2,4,16,16], index: 2, kind: output, shape index: {}, may-alias: {0,2}]
  %s3 = sld [smem:[#allocation0]]
  $region53: #{tpu_custom_call.1} parent=0
    _
  %s5 = ssub.s32 1, %s3
  %s6 = scalar_select 0, %s5, %s3
  $region1: #{tpu_custom_call.1} parent=0
    #allocation3 [shape = 'u8[32768]{0}', space=vmem, size = 0x8000, scoped, tag = 'input window, operand 0']
    #allocation4 [shape = 's32[2]{0}', space=sflag, size = 0x8, scoped, tag = 'scoped memory for tpu_custom_call.1']
    #allocation5 [shape = 's32[2]{0}', space=sflag, size = 0x8, scoped, tag = 'scoped memory for tpu_custom_call.1']
    #allocation6 [shape = 's32[2]{0}', space=sflag, size = 0x8, scoped, tag = 'scoped memory for tpu_custom_call.1']
    #allocation7 [shape = 'u8[512]{0}', space=smem, size = 0x200, scoped, tag = 'input window, operand 1, single buffered']
    #allocation8 [shape = 'u8[32768]{0}', space=vmem, size = 0x8000, scoped, tag = 'output window, operand 0']
    %7 = vsyncpa [#allocation4], 0
    %s8 = scalar_lea.sflag [#allocation4], 1
    %9 = vsyncpa %s8, 0
    %10 = vsyncpa [#allocation6], 0
    %11 = vsyncpa [#allocation5], 0
    %s12 = scalar_lea.sflag [#allocation5], 1
    %13 = vsyncpa %s12, 0
    loop: start=0, step=1, limit=4
    $region2: #{tpu_custom_call.1} parent=1 // loop_pre_header
      _
    $region3: #{tpu_custom_call.1} parent=1 // loop_header
      %s15 = sphi 0, %s19
      %p16 = scmp.ge.s32.totalorder %s15, 4
      %s22 = sphi 0, %s34
      %s23 = sphi 0, %s30
      %s24 = sphi 0, %s22
      %s25 = sphi 0, %s23
      %s26 = sphi 0, %s24
      %s27 = sphi 0, %s25
      %s37 = sphi 0, %s39
      %s40 = sphi 0, %s37
      %s41 = sphi 0, %s40
      %s57 = sphi 0, %s41
      %s61 = sphi 0, %s61
      %s63 = sphi 0, %s61
      %s64 = sphi 0, %s63
      %s78 = sphi 0, %s64
      %s86 = sphi 0, %s88
      %s89 = sphi 0, %s86
      %s90 = sphi 0, %s89
      %s106 = sphi 0, %s90
    $region4: #{tpu_custom_call.1} parent=1 // loop_header_branch
      %18 = sbr.rel (%p16) target = $region8
    $region5: #{tpu_custom_call.1} parent=1 // loop_body
      %s20 = ssub.s32 %s15, 1
      %s21 = ssub.s32 %s15, 2
      %s28 = sadd.s32 1, %s23
      %p29 = scmp.ge.s32.totalorder %s28, 1
      %s30 = scalar_select %p29, 0, %s28
      %s31 = sadd.s32 1, %s22
      %s32 = scalar_select %p29, %s31, %s22
      %p33 = scmp.ge.s32.totalorder %s32, 2
      %s34 = scalar_select %p33, 0, %s32
      %s35 = ssub.s32 %s22, %s34
      %p36 = scmp.eq.s32.totalorder %s35, 0
      %s38 = sadd.s32 %s37, 1
      %s39 = scalar_select %p36, %s37, %s38
      %p42 = pneg %p36
      %p43 = scmp.eq.s32.totalorder %s15, 1
      %p44 = por %p42, %p43
      %p45 = scmp.ne.s32.totalorder %s37, %s40
      %p46 = scmp.eq.s32.totalorder %s15, 0
      %p47 = por %p45, %p46
      %p48 = scmp.ne.s32.totalorder %s37, %s40
      %p49 = scmp.eq.s32.totalorder %s20, 1
      %p50 = por %p48, %p49
      %p51 = scmp.ne.s32.totalorder %s40, %s41
      %p52 = scmp.eq.s32.totalorder %s20, 0
      %p53 = por %p51, %p52
      %p54 = scmp.ne.s32.totalorder %s40, %s41
      %p55 = scmp.eq.s32.totalorder %s21, 1
      %p56 = por %p54, %p55
      %p58 = scmp.ne.s32.totalorder %s41, %s57
      %p59 = scmp.eq.s32.totalorder %s21, 0
      %p60 = por %p58, %p59
      %s62 = sadd.s32 %s61, 1
      %p65 = scmp.eq.s32.totalorder %s15, 1
      %p66 = scmp.ne.s32.totalorder %s61, %s63
      %p67 = scmp.eq.s32.totalorder %s15, 0
      %p68 = por %p66, %p67
      %p69 = scmp.ne.s32.totalorder %s61, %s63
      %p70 = scmp.eq.s32.totalorder %s20, 1
      %p71 = por %p69, %p70
      %p72 = scmp.ne.s32.totalorder %s63, %s64
      %p73 = scmp.eq.s32.totalorder %s20, 0
      %p74 = por %p72, %p73
      %p75 = scmp.ne.s32.totalorder %s63, %s64
      %p76 = scmp.eq.s32.totalorder %s21, 1
      %p77 = por %p75, %p76
      %p79 = scmp.ne.s32.totalorder %s64, %s78
      %p80 = scmp.eq.s32.totalorder %s21, 0
      %p81 = por %p79, %p80
      %s82 = ssub.s32 %s22, %s34
      %s83 = ssub.s32 %s23, %s30
      %s84 = sor.u32 %s82, %s83
      %p85 = scmp.eq.s32.totalorder %s84, 0
      %s87 = sadd.s32 %s86, 1
      %s88 = scalar_select %p85, %s86, %s87
      %p91 = pneg %p85
      %p92 = scmp.eq.s32.totalorder %s15, 1
      %p93 = por %p91, %p92
      %p94 = scmp.ne.s32.totalorder %s86, %s89
      %p95 = scmp.eq.s32.totalorder %s15, 0
      %p96 = por %p94, %p95
      %p97 = scmp.ne.s32.totalorder %s86, %s89
      %p98 = scmp.eq.s32.totalorder %s20, 1
      %p99 = por %p97, %p98
      %p100 = scmp.ne.s32.totalorder %s89, %s90
      %p101 = scmp.eq.s32.totalorder %s20, 0
      %p102 = por %p100, %p101
      %p103 = scmp.ne.s32.totalorder %s89, %s90
      %p104 = scmp.eq.s32.totalorder %s21, 1
      %p105 = por %p103, %p104
      %p107 = scmp.ne.s32.totalorder %s90, %s106
      %p108 = scmp.eq.s32.totalorder %s21, 0
      %p109 = por %p107, %p108
      %p110 = scmp.le.s32.totalorder 1, %s15
      %p111 = scmp.lt.s32.totalorder %s15, 3
      %p112 = pnand %p110, %p111
      %p113 = pneg %p112
      // Predicated region
      $region9: #{tpu_custom_call.1} parent=5 // pred_check
        _
      $region10: #{tpu_custom_call.1} parent=5 // pred_check_branch
        %115 = sbr.rel (%p112) target = $region12
      $region11: #{tpu_custom_call.1} parent=5 // pred_region
        %s116 = ssub.s32 %s15, 1
        // Predicated region
        $region13: #{tpu_custom_call.1} parent=11 // pred_check
          %p117 = pneg %p74
        $region14: #{tpu_custom_call.1} parent=11 // pred_check_branch
          %119 = sbr.rel (%p117) target = $region16
        $region15: #{tpu_custom_call.1} parent=11 // pred_region
          %121 = vsyncadd [#allocation6], 0
          %s123 = sshll.u32 %s1, 4
          %s124 = int_to_ptr.vmem [resolvable:$true] %s123
          %126 = dma.vmem_to_smem %s124, 16, [#allocation7], [#allocation6]
        $region16: #{tpu_custom_call.1} parent=11 // pred_fallthru
          _
      $region12: #{tpu_custom_call.1} parent=5 // pred_fallthru
        _
      %p127 = scmp.lt.s32.totalorder %s15, 2
      // Predicated region
      $region17: #{tpu_custom_call.1} parent=5 // pred_check
        %p128 = pneg %p127
      $region18: #{tpu_custom_call.1} parent=5 // pred_check_branch
        %130 = sbr.rel (%p128) target = $region20
      $region19: #{tpu_custom_call.1} parent=5 // pred_region
        // Predicated region
        $region21: #{tpu_custom_call.1} parent=19 // pred_check
          %p131 = pneg %p47
        $region22: #{tpu_custom_call.1} parent=19 // pred_check_branch
          %133 = sbr.rel (%p131) target = $region24
        $region23: #{tpu_custom_call.1} parent=19 // pred_region
          %s134 = sand.u32 %s37, 1
          %s135 = scalar_lea.sflag [#allocation4], %s134
          %s136 = sand.u32 %s37, 1
          %s137 = smul.addr %s136, 32
          %s138 = scalar_lea.vmem [#allocation3], %s137
          %140 = vsyncadd %s135, 0
          %s141 = smul.addr %s22, 8
          %s142 = sadd.s32 4, %s141
          %s143 = smul.addr %s142, 8
          %s144 = scalar_lea.hbm %s0, %s143
          %s145 = sshll.u32 %s144, 4
          %s146 = int_to_ptr.hbm [resolvable:$true] %s145
          %s147 = sshll.u32 %s138, 4
          %s148 = int_to_ptr.vmem [resolvable:$true] %s147
          %153 = dma.hbm_to_vmem [thread:$0]  %s146, 512, %s148, %s135, 128, 128, 8
        $region24: #{tpu_custom_call.1} parent=19 // pred_fallthru
          _
      $region20: #{tpu_custom_call.1} parent=5 // pred_fallthru
        _
      %p154 = scmp.le.s32.totalorder 1, %s15
      %p155 = scmp.lt.s32.totalorder %s15, 3
      %p156 = pnand %p154, %p155
      %p157 = pneg %p156
      // Predicated region
      $region25: #{tpu_custom_call.1} parent=5 // pred_check
        _
      $region26: #{tpu_custom_call.1} parent=5 // pred_check_branch
        %159 = sbr.rel (%p156) target = $region28
      $region27: #{tpu_custom_call.1} parent=5 // pred_region
        %s160 = ssub.s32 %s15, 1
        %s161 = sand.u32 %s40, 1
        %s162 = scalar_lea.sflag [#allocation4], %s161
        %s163 = sand.u32 %s40, 1
        %s164 = smul.addr %s163, 32
        %s165 = scalar_lea.vmem [#allocation3], %s164
        // Predicated region
        $region29: #{tpu_custom_call.1} parent=27 // pred_check
          %p166 = pneg %p53
        $region30: #{tpu_custom_call.1} parent=27 // pred_check_branch
          %168 = sbr.rel (%p166) target = $region32
        $region31: #{tpu_custom_call.1} parent=27 // pred_region
          %170 = dma.done %s162, 512
        $region32: #{tpu_custom_call.1} parent=27 // pred_fallthru
          _
        // Predicated region
        $region33: #{tpu_custom_call.1} parent=27 // pred_check
          %p171 = pneg %p74
        $region34: #{tpu_custom_call.1} parent=27 // pred_check_branch
          %173 = sbr.rel (%p171) target = $region36
        $region35: #{tpu_custom_call.1} parent=27 // pred_region
          %175 = dma.done [#allocation6], 16
        $region36: #{tpu_custom_call.1} parent=27 // pred_fallthru
          _
        %176 = sfence
        %s177 = sand.u32 %s40, 1
        %s178 = scalar_lea.sflag [#allocation4], %s177
        %s179 = sand.u32 %s40, 1
        %s180 = smul.addr %s179, 32
        %s181 = scalar_lea.vmem [#allocation3], %s180
        %p182 = pneg %p53
        %p183 = pneg %p50
        %p184 = pneg %p74
        %p185 = pneg %p71
        %p186 = pneg %p102
        %p187 = pneg %p99
        %s188 = sand.u32 %s89, 1
        %s189 = scalar_lea.sflag [#allocation5], %s188
        %s190 = sand.u32 %s89, 1
        %s191 = smul.addr %s190, 32
        %s192 = scalar_lea.vmem [#allocation8], %s191
        %s193 = smul.u32 2, %s25
        %p194 = scmp.eq.s32.totalorder %s25, 0
        // Predicated region
        $region37: #{tpu_custom_call.1} parent=27 // pred_check
          %p195 = pneg %p194
        $region38: #{tpu_custom_call.1} parent=27 // pred_check_branch
          %197 = sbr.rel (%p195) target = $region40
        $region39: #{tpu_custom_call.1} parent=27 // pred_region
          %198 = vst [vmem:[#allocation2] sm:$0x1] 0.0
          %199 = vst [vmem:[#allocation2 + $0x18] sm:$0x1] 0.0
          %200 = vst [vmem:[#allocation2 + $0x11] sm:$0x1] 0.0
          %201 = vst [vmem:[#allocation2 + $0x29] sm:$0x1] 0.0
          %vm202 = vcmask 1047680
          %203 = vst.msk [vmem:[#allocation2 + $0x1] sm:$0xff] %vm202, 0.0
          %204 = vst.msk [vmem:[#allocation2 + $0x9] sm:$0xff] %vm202, 0.0
          %205 = vst.msk [vmem:[#allocation2 + $0x19] sm:$0xff] %vm202, 0.0
          %206 = vst.msk [vmem:[#allocation2 + $0x21] sm:$0xff] %vm202, 0.0
          %v207 = vld [vmem:[%s165] sm:$0xff]
          %v208 = vld [vmem:[%s165 + $0x8] sm:$0xff]
          %v209 = vld [vmem:[%s165 + $0x10] sm:$0xff]
          %v210 = vld [vmem:[%s165 + $0x18] sm:$0xff]
          %vm211 = vcmask 130048
          %212 = vst.msk [vmem:[#allocation2 + $0x1] sm:$0xff] %vm211, %v207
          %213 = vst.msk [vmem:[#allocation2 + $0x9] sm:$0xff] %vm211, %v208
          %214 = vst.msk [vmem:[#allocation2 + $0x19] sm:$0xff] %vm211, %v209
          %215 = vst.msk [vmem:[#allocation2 + $0x21] sm:$0xff] %vm211, %v210
        $region40: #{tpu_custom_call.1} parent=27 // pred_fallthru
          _
        %s216 = smul.u32 %s25, 16
        %s217 = scalar_lea.vmem [#allocation2], %s216
        %v218 = vld [vmem:[%s217] sm:$0xff]
        %v219 = vld [vmem:[%s217 + $0x8] sm:$0xff]
        %220 = vrot.lane.b32.xlu0 %v218, 1
        %v221 = vpop.permute.xlu0 %220
        %222 = vrot.lane.b32.xlu0 %v219, 1
        %v223 = vpop.permute.xlu0 %222
        %s224 = sld [smem:[#allocation7]]
        %v225 = vstv %s224
        %v226 = vmul.f32 %v221, %v225
        %v227 = vmul.f32 %v223, %v225
        %v228 = vadd.f32 %v226, 0.0
        %v229 = vadd.f32 %v227, 0.0
        %s230 = sld [smem:[#allocation7 + $0x12]]
        %v231 = vstv %s230
        %v232 = vmul.f32 %v221, %v231
        %v233 = vmul.f32 %v223, %v231
        %v234 = vadd.f32 %v232, 0.0
        %v235 = vadd.f32 %v233, 0.0
        %s236 = sld [smem:[#allocation7 + $0x1]]
        %v237 = vstv %s236
        %v238 = vmul.f32 %v218, %v237
        %v239 = vmul.f32 %v219, %v237
        %v240 = vadd.f32 %v228, %v238
        %v241 = vadd.f32 %v229, %v239
        %s242 = sld [smem:[#allocation7 + $0x13]]
        %v243 = vstv %s242
        %v244 = vmul.f32 %v218, %v243
        %v245 = vmul.f32 %v219, %v243
        %v246 = vadd.f32 %v234, %v244
        %v247 = vadd.f32 %v235, %v245
        %248 = vrot.lane.b32.xlu0 %v218, 127
        %v249 = vpop.permute.xlu0 %248
        %250 = vrot.lane.b32.xlu0 %v219, 127
        %v251 = vpop.permute.xlu0 %250
        %s252 = sld [smem:[#allocation7 + $0x2]]
        %v253 = vstv %s252
        %v254 = vmul.f32 %v249, %v253
        %v255 = vmul.f32 %v251, %v253
        %v256 = vadd.f32 %v240, %v254
        %v257 = vadd.f32 %v241, %v255
        %s258 = sld [smem:[#allocation7 + $0x14]]
        %v259 = vstv %s258
        %v260 = vmul.f32 %v249, %v259
        %v261 = vmul.f32 %v251, %v259
        %v262 = vadd.f32 %v246, %v260
        %v263 = vadd.f32 %v247, %v261
        %s264 = sadd.s32 %s216, 1
        %s265 = scalar_lea.vmem [#allocation2], %s264
        %v266 = vld [vmem:[%s265] sm:$0xff]
        %v267 = vld [vmem:[%s265 + $0x8] sm:$0xff]
        %268 = vrot.lane.b32.xlu0 %v266, 1
        %v269 = vpop.permute.xlu0 %268
        %270 = vrot.lane.b32.xlu0 %v267, 1
        %v271 = vpop.permute.xlu0 %270
        %s272 = sld [smem:[#allocation7 + $0x3]]
        %v273 = vstv %s272
        %v274 = vmul.f32 %v269, %v273
        %v275 = vmul.f32 %v271, %v273
        %v276 = vadd.f32 %v256, %v274
        %v277 = vadd.f32 %v257, %v275
        %s278 = sld [smem:[#allocation7 + $0x15]]
        %v279 = vstv %s278
        %v280 = vmul.f32 %v269, %v279
        %v281 = vmul.f32 %v271, %v279
        %v282 = vadd.f32 %v262, %v280
        %v283 = vadd.f32 %v263, %v281
        %s284 = sld [smem:[#allocation7 + $0x4]]
        %v285 = vstv %s284
        %v286 = vmul.f32 %v266, %v285
        %v287 = vmul.f32 %v267, %v285
        %v288 = vadd.f32 %v276, %v286
        %v289 = vadd.f32 %v277, %v287
        %s290 = sld [smem:[#allocation7 + $0x16]]
        %v291 = vstv %s290
        %v292 = vmul.f32 %v266, %v291
        %v293 = vmul.f32 %v267, %v291
        %v294 = vadd.f32 %v282, %v292
        %v295 = vadd.f32 %v283, %v293
        %296 = vrot.lane.b32.xlu0 %v266, 127
        %v297 = vpop.permute.xlu0 %296
        %298 = vrot.lane.b32.xlu0 %v267, 127
        %v299 = vpop.permute.xlu0 %298
        %s300 = sld [smem:[#allocation7 + $0x5]]
        %v301 = vstv %s300
        %v302 = vmul.f32 %v297, %v301
        %v303 = vmul.f32 %v299, %v301
        %v304 = vadd.f32 %v288, %v302
        %v305 = vadd.f32 %v289, %v303
        %s306 = sld [smem:[#allocation7 + $0x17]]
        %v307 = vstv %s306
        %v308 = vmul.f32 %v297, %v307
        %v309 = vmul.f32 %v299, %v307
        %v310 = vadd.f32 %v294, %v308
        %v311 = vadd.f32 %v295, %v309
        %s312 = sadd.s32 %s216, 2
        %s313 = scalar_lea.vmem [#allocation2], %s312
        %v314 = vld [vmem:[%s313] sm:$0xff]
        %v315 = vld [vmem:[%s313 + $0x8] sm:$0xff]
        %316 = vrot.lane.b32.xlu0 %v314, 1
        %v317 = vpop.permute.xlu0 %316
        %318 = vrot.lane.b32.xlu0 %v315, 1
        %v319 = vpop.permute.xlu0 %318
        %s320 = sld [smem:[#allocation7 + $0x6]]
        %v321 = vstv %s320
        %v322 = vmul.f32 %v317, %v321
        %v323 = vmul.f32 %v319, %v321
        %v324 = vadd.f32 %v304, %v322
        %v325 = vadd.f32 %v305, %v323
        %s326 = sld [smem:[#allocation7 + $0x18]]
        %v327 = vstv %s326
        %v328 = vmul.f32 %v317, %v327
        %v329 = vmul.f32 %v319, %v327
        %v330 = vadd.f32 %v310, %v328
        %v331 = vadd.f32 %v311, %v329
        %s332 = sld [smem:[#allocation7 + $0x7]]
        %v333 = vstv %s332
        %v334 = vmul.f32 %v314, %v333
        %v335 = vmul.f32 %v315, %v333
        %v336 = vadd.f32 %v324, %v334
        %v337 = vadd.f32 %v325, %v335
        %s338 = sld [smem:[#allocation7 + $0x19]]
        %v339 = vstv %s338
        %v340 = vmul.f32 %v314, %v339
        %v341 = vmul.f32 %v315, %v339
        %v342 = vadd.f32 %v330, %v340
        %v343 = vadd.f32 %v331, %v341
        %344 = vrot.lane.b32.xlu0 %v314, 127
        %v345 = vpop.permute.xlu0 %344
        %346 = vrot.lane.b32.xlu0 %v315, 127
        %v347 = vpop.permute.xlu0 %346
        %s348 = sld [smem:[#allocation7 + $0x8]]
        %v349 = vstv %s348
        %v350 = vmul.f32 %v345, %v349
        %v351 = vmul.f32 %v347, %v349
        %v352 = vadd.f32 %v336, %v350
        %v353 = vadd.f32 %v337, %v351
        %s354 = sld [smem:[#allocation7 + $0x1a]]
        %v355 = vstv %s354
        %v356 = vmul.f32 %v345, %v355
        %v357 = vmul.f32 %v347, %v355
        %v358 = vadd.f32 %v342, %v356
        %v359 = vadd.f32 %v343, %v357
        %s360 = sadd.s32 %s216, 24
        %s361 = scalar_lea.vmem [#allocation2], %s360
        %v362 = vld [vmem:[%s361] sm:$0xff]
        %v363 = vld [vmem:[%s361 + $0x8] sm:$0xff]
        %364 = vrot.lane.b32.xlu0 %v362, 1
        %v365 = vpop.permute.xlu0 %364
        %366 = vrot.lane.b32.xlu0 %v363, 1
        %v367 = vpop.permute.xlu0 %366
        %s368 = sld [smem:[#allocation7 + $0x9]]
        %v369 = vstv %s368
        %v370 = vmul.f32 %v365, %v369
        %v371 = vmul.f32 %v367, %v369
        %v372 = vadd.f32 %v352, %v370
        %v373 = vadd.f32 %v353, %v371
        %s374 = sld [smem:[#allocation7 + $0x1b]]
        %v375 = vstv %s374
        %v376 = vmul.f32 %v365, %v375
        %v377 = vmul.f32 %v367, %v375
        %v378 = vadd.f32 %v358, %v376
        %v379 = vadd.f32 %v359, %v377
        %s380 = sld [smem:[#allocation7 + $0xa]]
        %v381 = vstv %s380
        %v382 = vmul.f32 %v362, %v381
        %v383 = vmul.f32 %v363, %v381
        %v384 = vadd.f32 %v372, %v382
        %v385 = vadd.f32 %v373, %v383
        %s386 = sld [smem:[#allocation7 + $0x1c]]
        %v387 = vstv %s386
        %v388 = vmul.f32 %v362, %v387
        %v389 = vmul.f32 %v363, %v387
        %v390 = vadd.f32 %v378, %v388
        %v391 = vadd.f32 %v379, %v389
        %392 = vrot.lane.b32.xlu0 %v362, 127
        %v393 = vpop.permute.xlu0 %392
        %394 = vrot.lane.b32.xlu0 %v363, 127
        %v395 = vpop.permute.xlu0 %394
        %s396 = sld [smem:[#allocation7 + $0xb]]
        %v397 = vstv %s396
        %v398 = vmul.f32 %v393, %v397
        %v399 = vmul.f32 %v395, %v397
        %v400 = vadd.f32 %v384, %v398
        %v401 = vadd.f32 %v385, %v399
        %s402 = sld [smem:[#allocation7 + $0x1d]]
        %v403 = vstv %s402
        %v404 = vmul.f32 %v393, %v403
        %v405 = vmul.f32 %v395, %v403
        %v406 = vadd.f32 %v390, %v404
        %v407 = vadd.f32 %v391, %v405
        %s408 = sadd.s32 %s264, 24
        %s409 = scalar_lea.vmem [#allocation2], %s408
        %v410 = vld [vmem:[%s409] sm:$0xff]
        %v411 = vld [vmem:[%s409 + $0x8] sm:$0xff]
        %412 = vrot.lane.b32.xlu0 %v410, 1
        %v413 = vpop.permute.xlu0 %412
        %414 = vrot.lane.b32.xlu0 %v411, 1
        %v415 = vpop.permute.xlu0 %414
        %s416 = sld [smem:[#allocation7 + $0xc]]
        %v417 = vstv %s416
        %v418 = vmul.f32 %v413, %v417
        %v419 = vmul.f32 %v415, %v417
        %v420 = vadd.f32 %v400, %v418
        %v421 = vadd.f32 %v401, %v419
        %s422 = sld [smem:[#allocation7 + $0x1e]]
        %v423 = vstv %s422
        %v424 = vmul.f32 %v413, %v423
        %v425 = vmul.f32 %v415, %v423
        %v426 = vadd.f32 %v406, %v424
        %v427 = vadd.f32 %v407, %v425
        %s428 = sld [smem:[#allocation7 + $0xd]]
        %v429 = vstv %s428
        %v430 = vmul.f32 %v410, %v429
        %v431 = vmul.f32 %v411, %v429
        %v432 = vadd.f32 %v420, %v430
        %v433 = vadd.f32 %v421, %v431
        %s434 = sld [smem:[#allocation7 + $0x1f]]
        %v435 = vstv %s434
        %v436 = vmul.f32 %v410, %v435
        %v437 = vmul.f32 %v411, %v435
        %v438 = vadd.f32 %v426, %v436
        %v439 = vadd.f32 %v427, %v437
        %440 = vrot.lane.b32.xlu0 %v410, 127
        %v441 = vpop.permute.xlu0 %440
        %442 = vrot.lane.b32.xlu0 %v411, 127
        %v443 = vpop.permute.xlu0 %442
        %s444 = sld [smem:[#allocation7 + $0xe]]
        %v445 = vstv %s444
        %v446 = vmul.f32 %v441, %v445
        %v447 = vmul.f32 %v443, %v445
        %v448 = vadd.f32 %v432, %v446
        %v449 = vadd.f32 %v433, %v447
        %s450 = sld [smem:[#allocation7 + $0x20]]
        %v451 = vstv %s450
        %v452 = vmul.f32 %v441, %v451
        %v453 = vmul.f32 %v443, %v451
        %v454 = vadd.f32 %v438, %v452
        %v455 = vadd.f32 %v439, %v453
        %s456 = sadd.s32 %s312, 24
        %s457 = scalar_lea.vmem [#allocation2], %s456
        %v458 = vld [vmem:[%s457] sm:$0xff]
        %v459 = vld [vmem:[%s457 + $0x8] sm:$0xff]
        %460 = vrot.lane.b32.xlu0 %v458, 1
        %v461 = vpop.permute.xlu0 %460
        %462 = vrot.lane.b32.xlu0 %v459, 1
        %v463 = vpop.permute.xlu0 %462
        %s464 = sld [smem:[#allocation7 + $0xf]]
        %v465 = vstv %s464
        %v466 = vmul.f32 %v461, %v465
        %v467 = vmul.f32 %v463, %v465
        %v468 = vadd.f32 %v448, %v466
        %v469 = vadd.f32 %v449, %v467
        %s470 = sld [smem:[#allocation7 + $0x21]]
        %v471 = vstv %s470
        %v472 = vmul.f32 %v461, %v471
        %v473 = vmul.f32 %v463, %v471
        %v474 = vadd.f32 %v454, %v472
        %v475 = vadd.f32 %v455, %v473
        %s476 = sld [smem:[#allocation7 + $0x10]]
        %v477 = vstv %s476
        %v478 = vmul.f32 %v458, %v477
        %v479 = vmul.f32 %v459, %v477
        %v480 = vadd.f32 %v468, %v478
        %v481 = vadd.f32 %v469, %v479
        %s482 = sld [smem:[#allocation7 + $0x22]]
        %v483 = vstv %s482
        %v484 = vmul.f32 %v458, %v483
        %v485 = vmul.f32 %v459, %v483
        %v486 = vadd.f32 %v474, %v484
        %v487 = vadd.f32 %v475, %v485
        %488 = vrot.lane.b32.xlu0 %v458, 127
        %v489 = vpop.permute.xlu0 %488
        %490 = vrot.lane.b32.xlu0 %v459, 127
        %v491 = vpop.permute.xlu0 %490
        %s492 = sld [smem:[#allocation7 + $0x11]]
        %v493 = vstv %s492
        %v494 = vmul.f32 %v489, %v493
        %v495 = vmul.f32 %v491, %v493
        %v496 = vadd.f32 %v480, %v494
        %v497 = vadd.f32 %v481, %v495
        %s498 = sld [smem:[#allocation7 + $0x23]]
        %v499 = vstv %s498
        %v500 = vmul.f32 %v489, %v499
        %v501 = vmul.f32 %v491, %v499
        %v502 = vadd.f32 %v486, %v500
        %v503 = vadd.f32 %v487, %v501
        %vm504 = vcmask 130048
        %505 = vst.msk [vmem:[%s192] sm:$0xff] %vm504, %v496
        %506 = vst.msk [vmem:[%s192 + $0x8] sm:$0xff] %vm504, %v497
        %s507 = scalar_lea.vmem %s192, 16 [#allocation8]
        %508 = vst.msk [vmem:[%s507] sm:$0xff] %vm504, %v502
        %509 = vst.msk [vmem:[%s507 + $0x8] sm:$0xff] %vm504, %v503
        %s510 = sand.u32 %s89, 1
        %s511 = scalar_lea.sflag [#allocation5], %s510
        %s512 = sand.u32 %s89, 1
        %s513 = smul.addr %s512, 32
        %s514 = scalar_lea.vmem [#allocation8], %s513
        // Predicated region
        $region41: #{tpu_custom_call.1} parent=27 // pred_check
          %p515 = pneg %p99
        $region42: #{tpu_custom_call.1} parent=27 // pred_check_branch
          %517 = sbr.rel (%p515) target = $region44
        $region43: #{tpu_custom_call.1} parent=27 // pred_region
          %s518 = smul.u32 2, %s25
          %520 = vsyncadd %s511, 0
          %s521 = sadd.s32 %s518, 4
          %s522 = smul.addr %s24, 8
          %s523 = sadd.s32 %s521, %s522
          %s524 = smul.addr %s523, 8
          %s525 = scalar_lea.hbm %s2, %s524
          %s526 = sshll.u32 %s514, 4
          %s527 = int_to_ptr.vmem [resolvable:$true] %s526
          %s528 = sshll.u32 %s525, 4
          %s529 = int_to_ptr.hbm [resolvable:$true] %s528
          %534 = dma.vmem_to_hbm [thread:$0]  %s527, 512, %s529, %s511, 128, 128, 8
        $region44: #{tpu_custom_call.1} parent=27 // pred_fallthru
          _
      $region28: #{tpu_custom_call.1} parent=5 // pred_fallthru
        _
      %p535 = scmp.le.s32.totalorder 2, %s15
      // Predicated region
      $region45: #{tpu_custom_call.1} parent=5 // pred_check
        %p536 = pneg %p535
      $region46: #{tpu_custom_call.1} parent=5 // pred_check_branch
        %538 = sbr.rel (%p536) target = $region48
      $region47: #{tpu_custom_call.1} parent=5 // pred_region
        %s539 = ssub.s32 %s15, 2
        // Predicated region
        $region49: #{tpu_custom_call.1} parent=47 // pred_check
          %p540 = pneg %p105
        $region50: #{tpu_custom_call.1} parent=47 // pred_check_branch
          %542 = sbr.rel (%p540) target = $region52
        $region51: #{tpu_custom_call.1} parent=47 // pred_region
          %s543 = sand.u32 %s90, 1
          %s544 = scalar_lea.sflag [#allocation5], %s543
          %s545 = sand.u32 %s90, 1
          %s546 = smul.addr %s545, 32
          %s547 = scalar_lea.vmem [#allocation8], %s546
          %549 = dma.done %s544, 512
        $region52: #{tpu_custom_call.1} parent=47 // pred_fallthru
          _
      $region48: #{tpu_custom_call.1} parent=5 // pred_fallthru
        _
    $region6: #{tpu_custom_call.1} parent=1 // loop_footer
      %s19 = sadd.s32 1, %s15
    $region7: #{tpu_custom_call.1} parent=1 // loop_footer_branch
      %14 = sbr.rel target = $region3
    $region8: #{tpu_custom_call.1} parent=1 // loop_exit
      _
    %550 = vsyncpa [#allocation4], 1
    %s551 = scalar_lea.sflag [#allocation4], 1
    %552 = vsyncpa %s551, 1
    %553 = vsyncpa [#allocation5], 1
    %s554 = scalar_lea.sflag [#allocation5], 1
    %555 = vsyncpa %s554, 1
    %556 = vsyncpa [#allocation6], 1
    %s557 = scalar_lea.sflag [#allocation6], 1
    %558 = vsyncpa %s557, 1

</llo_original>
